<compile_context>
chip_gen: v7x
topology: tpu7x:2x2x1
jax: 0.10.0
libtpu: 0.0.40
codegen_flags: <defaults>
</compile_context>

<pallas_src>
import functools
import math

import jax
import jax.numpy as jnp
from jax.experimental import pallas as pl
from jax.experimental.pallas import tpu as pltpu


def _timeblock_kernel(x_ref, w_ref, o_ref, *, slab, n_valid, compute_dtype):
    # x_ref : (rows, T*C_in)        input block, native dtype
    # w_ref : (T*C_in, 2*slab)      block-Toeplitz weights [temp slab | gate slab]
    # o_ref : (rows, t_out*C_out)   lane-dense flattened output
    x = x_ref[...].astype(compute_dtype)
    y = jnp.dot(x, w_ref[...], preferred_element_type=jnp.float32)
    temp = y[:, :slab]                      # conv1 + conv2   (f32, aligned slab)
    gate = jax.nn.sigmoid(y[:, slab:])      # sigmoid(conv3)  (f32, EUP, aligned slab)
    out = jnp.maximum(gate * temp, 0.0)     # relu            (f32 epilogue)
    o_ref[...] = out[:, :n_valid].astype(o_ref.dtype)


def time_block_nonbias(x, w1, w2, w3, *, row_tile=None, compute_dtype=None,
                       out_dtype=None):
    """x: (B, N, T, C_in); w*: PyTorch Conv2d weight (C_out, C_in, 1, K).

    compute_dtype: dtype fed to the MXU (e.g. jnp.bfloat16 on v6e/v7x).
    out_dtype:     dtype of the stored output (bf16 halves HBM writes).
    Accumulation and the elementwise epilogue are always f32.
    """
    B, N, T, c_in = x.shape
    c_out, c_in_w, kh, K = w1.shape
    assert c_in_w == c_in and kh == 1
    t_out = T - K + 1
    R = B * N
    n_valid = t_out * c_out
    slab = ((n_valid + 127) // 128) * 128        # 128-aligned per-branch slab

    if compute_dtype is None:
        compute_dtype = x.dtype
    if out_dtype is None:
        out_dtype = x.dtype

    if row_tile is None:
        if R <= 1024:
            # Single grid step: block == full array (no padding / divisibility
            # requirement); avoids serial-loop overhead on v5e/v6e.
            row_tile = R
        else:
            # Large multiple-of-8 tiles; >=2 steps so v7x's two TCs get work.
            row_tile = min(4096, max(8, ((R + 1) // 2 // 8) * 8))
    n_steps = pl.cdiv(R, row_tile)

    # Flatten input to (R, T*C_in): contiguous merge, no data movement.
    x2 = x.reshape(R, T * c_in)

    # Block-Toeplitz weight expansion (done once at trace time, tiny):
    #   W[t'*C_in + ci, t*C_out + c] = w[c, ci, 0, t'-t]  if 0 <= t'-t < K else 0
    def to_toeplitz(w):
        w_kco = jnp.transpose(w[:, :, 0, :], (2, 1, 0))          # (K, C_in, C_out)
        Wt = jnp.zeros((T, c_in, t_out, c_out), dtype=jnp.float32)
        for t in range(t_out):
            Wt = Wt.at[t:t + K, :, t, :].set(w_kco)
        Wt = Wt.reshape(T * c_in, n_valid)
        if slab > n_valid:
            Wt = jnp.pad(Wt, ((0, 0), (0, slab - n_valid)))
        return Wt

    # conv is linear in the weight: conv_{w1}(X)+conv_{w2}(X) = conv_{w1+w2}(X)
    w_cat = jnp.concatenate([to_toeplitz(w1 + w2), to_toeplitz(w3)],
                            axis=-1).astype(compute_dtype)       # (T*C_in, 2*slab)

    itemsize = lambda d: jnp.dtype(d).itemsize
    in_blk = row_tile * T * c_in * itemsize(x.dtype)
    out_blk = row_tile * n_valid * itemsize(out_dtype)
    w_bytes = T * c_in * 2 * slab * itemsize(compute_dtype)
    vmem_limit = int(min(100 * 1024 * 1024,
                         max(16 * 1024 * 1024,
                             2 * (in_blk + out_blk) + 2 * w_bytes + (4 << 20))))

    cost = pl.CostEstimate(
        flops=2 * R * (T * c_in) * (2 * slab),
        transcendentals=R * slab,
        bytes_accessed=(R * T * c_in * itemsize(x.dtype)
                        + w_bytes
                        + R * n_valid * itemsize(out_dtype)),
    )

    out_flat = pl.pallas_call(
        functools.partial(_timeblock_kernel, slab=slab, n_valid=n_valid,
                          compute_dtype=compute_dtype),
        out_shape=jax.ShapeDtypeStruct((R, n_valid), out_dtype),
        grid_spec=pltpu.PrefetchScalarGridSpec(
            num_scalar_prefetch=0,
            grid=(n_steps,),
            in_specs=[
                pl.BlockSpec((row_tile, T * c_in), lambda i: (i, 0)),
                pl.BlockSpec((T * c_in, 2 * slab), lambda i: (0, 0)),
            ],
            out_specs=pl.BlockSpec((row_tile, n_valid), lambda i: (i, 0)),
        ),
        compiler_params=pltpu.CompilerParams(
            dimension_semantics=("parallel",),
            vmem_limit_bytes=vmem_limit),
        cost_estimate=cost,
    )(x2, w_cat)

    return out_flat.reshape(B, N, t_out, c_out)


def _reference(x, w1, w2, w3):
    """Pure-JAX reference matching the PyTorch forward."""
    xn = jnp.transpose(x, (0, 3, 1, 2))  # (B, C_in, N, T)

    def conv(w):
        return jax.lax.conv_general_dilated(
            xn, w, window_strides=(1, 1), padding="VALID",
            dimension_numbers=("NCHW", "OIHW", "NCHW"))

    temp = conv(w1) + conv(w2)
    gate = jax.nn.sigmoid(conv(w3))
    out = jnp.maximum(gate * temp, 0.0)
    return jnp.transpose(out, (0, 2, 3, 1))  # (B, N, T_out, C_out)


if __name__ == "__main__":
    # Small shapes consistent with the module: batch=2, nodes=16, time=8,
    # in_channels=4, out_channels=32, kernel_size=4.
    B, N, T, C_IN, C_OUT, K = 2, 16, 8, 4, 32, 4

    key = jax.random.PRNGKey(0)
    kx, k1, k2, k3 = jax.random.split(key, 4)

    x = jax.random.normal(kx, (B, N, T, C_IN), dtype=jnp.float32)

    # Deterministic Conv2d weight init (kaiming-uniform-like bound).
    fan_in = C_IN * 1 * K
    bound = 1.0 / math.sqrt(fan_in)
    init = lambda k: jax.random.uniform(
        k, (C_OUT, C_IN, 1, K), minval=-bound, maxval=bound, dtype=jnp.float32)
    w1, w2, w3 = init(k1), init(k2), init(k3)

    ref = _reference(x, w1, w2, w3)

    # f32 path (single grid step, exact): tight tolerance.
    out_f32 = jax.block_until_ready(time_block_nonbias(x, w1, w2, w3))
    assert out_f32.shape == (B, N, T - K + 1, C_OUT)
    assert jnp.allclose(out_f32, ref, atol=1e-5, rtol=1e-5)

    # Multi-step grid path (forced small row_tile) to exercise tiling.
    out_tiled = jax.block_until_ready(
        time_block_nonbias(x, w1, w2, w3, row_tile=16))
    assert jnp.allclose(out_tiled, ref, atol=1e-5, rtol=1e-5)

    # bf16 MXU-input + bf16 output path (v6e/v7x): f32 accumulation/epilogue,
    # looser tolerance for the bf16 rounding.
    out_bf16 = jax.block_until_ready(
        time_block_nonbias(x, w1, w2, w3,
                           compute_dtype=jnp.bfloat16, out_dtype=jnp.bfloat16))
    assert out_bf16.shape == (B, N, T - K + 1, C_OUT)
    assert jnp.allclose(out_bf16.astype(jnp.float32), ref, atol=5e-2, rtol=5e-2)

    print("KERNEL_OK")
</pallas_src>

<mosaic_0001>
module attributes {stable_mosaic.version = 11 : i64} {
  func.func @_timeblock_kernel(%arg0: i32, %arg1: memref<32x32xf32, #tpu.memory_space<vmem>>, %arg2: memref<32x512xf32, #tpu.memory_space<vmem>>, %arg3: memref<32x160xf32, #tpu.memory_space<vmem>>) attributes {dimension_semantics = [#tpu.dimension_semantics<parallel>], iteration_bounds = array<i64: 1>, scalar_prefetch = 0 : i64, scratch_operands = 0 : i64, tpu.core_type = #tpu.core_type<tc>, window_params = [{transform_indices = @transform_0, window_bounds = array<i64: 32, 32>}, {pipeline_mode = #tpu.pipeline_mode<synchronous>, transform_indices = @transform_1, window_bounds = array<i64: 32, 512>}, {transform_indices = @transform_2, window_bounds = array<i64: 32, 160>}]} {
    %c0 = arith.constant 0 : index
    %c0_0 = arith.constant 0 : index
    %0 = vector.load %arg1[%c0, %c0_0] : memref<32x32xf32, #tpu.memory_space<vmem>>, vector<32x32xf32>
    %c0_1 = arith.constant 0 : index
    %c0_2 = arith.constant 0 : index
    %1 = vector.load %arg2[%c0_1, %c0_2] : memref<32x512xf32, #tpu.memory_space<vmem>>, vector<32x512xf32>
    %cst = arith.constant dense<0.000000e+00> : vector<32x512xf32>
    %2 = tpu.matmul %0, %1, %cst {dimension_numbers = #tpu.dot_dimension_numbers<[1], [0], [0], [1], [0, 0, 1, 1], [], []>} : vector<32x32xf32>, vector<32x512xf32>, vector<32x512xf32> -> vector<32x512xf32>
    %3 = vector.extract_strided_slice %2 {offsets = [0, 0], sizes = [32, 256], strides = [1, 1]} : vector<32x512xf32> to vector<32x256xf32>
    %4 = vector.extract_strided_slice %2 {offsets = [0, 256], sizes = [32, 256], strides = [1, 1]} : vector<32x512xf32> to vector<32x256xf32>
    %5 = arith.negf %4 : vector<32x256xf32>
    %6 = math.exp %5 : vector<32x256xf32>
    %cst_3 = arith.constant 1.000000e+00 : f32
    %7 = vector.broadcast %cst_3 : f32 to vector<32x256xf32>
    %8 = arith.addf %7, %6 : vector<32x256xf32>
    %9 = arith.divf %7, %8 : vector<32x256xf32>
    %10 = arith.mulf %9, %3 : vector<32x256xf32>
    %cst_4 = arith.constant 0.000000e+00 : f32
    %11 = vector.broadcast %cst_4 : f32 to vector<32x256xf32>
    %12 = arith.maximumf %10, %11 : vector<32x256xf32>
    %13 = vector.extract_strided_slice %12 {offsets = [0, 0], sizes = [32, 160], strides = [1, 1]} : vector<32x256xf32> to vector<32x160xf32>
    %c0_5 = arith.constant 0 : index
    %c0_6 = arith.constant 0 : index
    %14 = vector.load %arg3[%c0_5, %c0_6] : memref<32x160xf32, #tpu.memory_space<vmem>>, vector<32x160xf32>
    tpu.vector_store %arg3[%c0_5, %c0_6], %13 {strides = array<i32>} : memref<32x160xf32, #tpu.memory_space<vmem>>, vector<32x160xf32>,
    return
  }
  func.func @transform_0(%arg0: i32) -> (i32, i32) {
    %c0_i32 = arith.constant 0 : i32
    %c0_i32_0 = arith.constant 0 : i32
    return %arg0, %c0_i32 : i32, i32
  }
  func.func @transform_1(%arg0: i32) -> (i32, i32) {
    %c0_i32 = arith.constant 0 : i32
    %c0_i32_0 = arith.constant 0 : i32
    %c0_i32_1 = arith.constant 0 : i32
    return %c0_i32, %c0_i32_0 : i32, i32
  }
  func.func @transform_2(%arg0: i32) -> (i32, i32) {
    %c0_i32 = arith.constant 0 : i32
    %c0_i32_0 = arith.constant 0 : i32
    return %arg0, %c0_i32 : i32, i32
  }
}

</mosaic_0001>

<llo_original>
// kernel: tpu_custom_call.1
$region0: #{tpu_custom_call.1}
  #allocation0 [shape = 'u32[]', space=smem, size = 0x4, offset = 0x4, fixed_abs, tag = 'smem constant byte address 0x4 - core index']
  #allocation1 [shape = 'u32[144,128]{1,0:T(1,128)}', space=vmem, size = 0x12000, scoped, tag = 'internal scratch']
  %s0 = inlined_call_operand.hbm [shape: f32[32,32], index: 0, kind: input, shape index: {}]
  %s1 = inlined_call_operand.hbm [shape: f32[32,512], index: 1, kind: input, shape index: {}]
  %s2 = inlined_call_operand.hbm [shape: f32[32,160], index: 2, kind: output, shape index: {}]
  %s3 = sld [smem:[#allocation0]]
  $region26: #{tpu_custom_call.1} parent=0
    _
  %s5 = ssub.s32 1, %s3
  %s6 = scalar_select 0, %s5, %s3
  $region1: #{tpu_custom_call.1} parent=0
    #allocation2 [shape = 'u8[16384]{0}', space=vmem, size = 0x4000, scoped, tag = 'input window, operand 0, single buffered']
    #allocation3 [shape = 's32[1]{0}', space=sflag, size = 0x4, scoped, tag = 'scoped memory for tpu_custom_call.1']
    #allocation4 [shape = 's32[1]{0}', space=sflag, size = 0x4, scoped, tag = 'scoped memory for tpu_custom_call.1']
    #allocation5 [shape = 'u8[65536]{0}', space=vmem, size = 0x10000, scoped, tag = 'input window, operand 1, single buffered']
    #allocation6 [shape = 's32[1]{0}', space=sflag, size = 0x4, scoped, tag = 'scoped memory for tpu_custom_call.1']
    #allocation7 [shape = 'u8[32768]{0}', space=vmem, size = 0x8000, scoped, tag = 'output window, operand 0, single buffered']
    %7 = vsyncpa [#allocation3], 0
    %8 = vsyncpa [#allocation6], 0
    %9 = vsyncpa [#allocation4], 0
    // Predicated region
    $region2: #{tpu_custom_call.1} parent=1 // pred_check
      _
    $region3: #{tpu_custom_call.1} parent=1 // pred_check_branch
      %11 = sbr.rel (0) target = $region5
    $region4: #{tpu_custom_call.1} parent=1 // pred_region
      %s13 = ssub.s32 512, 512
      %14 = vsyncadd [#allocation3], %s13
      %s15 = sshll.u32 [#allocation2], 4
      %s16 = int_to_ptr.vmem [resolvable:$true] %s15
      %21 = dma.hbm_to_vmem [thread:$0]  %s0, 512, %s16, [#allocation3], 128, 128, 8
    $region5: #{tpu_custom_call.1} parent=1 // pred_fallthru
      _
    // Predicated region
    $region6: #{tpu_custom_call.1} parent=1 // pred_check
      _
    $region7: #{tpu_custom_call.1} parent=1 // pred_check_branch
      %23 = sbr.rel (0) target = $region9
    $region8: #{tpu_custom_call.1} parent=1 // pred_region
      %s25 = ssub.s32 2048, 2048
      %26 = vsyncadd [#allocation6], %s25
      %s27 = sshll.u32 [#allocation5], 4
      %s28 = int_to_ptr.vmem [resolvable:$true] %s27
      %33 = dma.hbm_to_vmem [thread:$0]  %s1, 2048, %s28, [#allocation6], 512, 512, 32
    $region9: #{tpu_custom_call.1} parent=1 // pred_fallthru
      _
    // Predicated region
    $region10: #{tpu_custom_call.1} parent=1 // pred_check
      _
    $region11: #{tpu_custom_call.1} parent=1 // pred_check_branch
      %35 = sbr.rel (0) target = $region13
    $region12: #{tpu_custom_call.1} parent=1 // pred_region
      %36 = dma.done [#allocation3], 512
    $region13: #{tpu_custom_call.1} parent=1 // pred_fallthru
      _
    // Predicated region
    $region14: #{tpu_custom_call.1} parent=1 // pred_check
      _
    $region15: #{tpu_custom_call.1} parent=1 // pred_check_branch
      %38 = sbr.rel (0) target = $region17
    $region16: #{tpu_custom_call.1} parent=1 // pred_region
      %39 = dma.done [#allocation6], 2048
    $region17: #{tpu_custom_call.1} parent=1 // pred_fallthru
      _
    %v40 = vld [vmem:[#allocation2] sm:$0xff]
    %v41 = vld [vmem:[#allocation2 + $0x8] sm:$0xff]
    %v42 = vld [vmem:[#allocation2 + $0x10] sm:$0xff]
    %v43 = vld [vmem:[#allocation2 + $0x18] sm:$0xff]
    %v44 = vld [vmem:[#allocation5] sm:$0xff]
    %v45 = vld [vmem:[#allocation5 + $0x8] sm:$0xff]
    %v46 = vld [vmem:[#allocation5 + $0x10] sm:$0xff]
    %v47 = vld [vmem:[#allocation5 + $0x18] sm:$0xff]
    %v48 = vld [vmem:[#allocation5 + $0x20] sm:$0xff]
    %v49 = vld [vmem:[#allocation5 + $0x28] sm:$0xff]
    %v50 = vld [vmem:[#allocation5 + $0x30] sm:$0xff]
    %v51 = vld [vmem:[#allocation5 + $0x38] sm:$0xff]
    %v52 = vld [vmem:[#allocation5 + $0x40] sm:$0xff]
    %v53 = vld [vmem:[#allocation5 + $0x48] sm:$0xff]
    %v54 = vld [vmem:[#allocation5 + $0x50] sm:$0xff]
    %v55 = vld [vmem:[#allocation5 + $0x58] sm:$0xff]
    %v56 = vld [vmem:[#allocation5 + $0x60] sm:$0xff]
    %v57 = vld [vmem:[#allocation5 + $0x68] sm:$0xff]
    %v58 = vld [vmem:[#allocation5 + $0x70] sm:$0xff]
    %v59 = vld [vmem:[#allocation5 + $0x78] sm:$0xff]
    %vm60 = vcmask 261120
    %v62 = vsel %vm60, %v40, 0
    %v65 = vsel %vm60, %v41, 0
    %v68 = vsel %vm60, %v42, 0
    %v71 = vsel %vm60, %v43, 0
    %73 = vmatprep.subr.mxu0 %v45
    %74 = vmatpush1.msra.mxu0 %v44
    %75 = vmatprep.subr.mxu0 %v49
    %76 = vmatpush1.msra.mxu0 %v48
    %77 = vmatprep.subr.mxu0 %v53
    %78 = vmatpush1.msra.mxu0 %v52
    %79 = vmatprep.subr.mxu0 %v57
    %80 = vmatpush1.msra.mxu0 %v56
    %81 = vmatprep.subr.mxu0 0.0
    %82 = vmatpush1.msra.mxu0 0.0
    %83 = vmatprep.subr.mxu0 0.0
    %84 = vmatpush1.msra.mxu0 0.0
    %85 = vmatprep.subr.mxu0 0.0
    %86 = vmatpush1.msra.mxu0 0.0
    %87 = vmatprep.subr.mxu0 0.0
    %88 = vmatpush1.msra.mxu0 0.0
    %89 = vmatprep.subr.mxu0 0.0
    %90 = vmatpush1.msra.mxu0 0.0
    %91 = vmatprep.subr.mxu0 0.0
    %92 = vmatpush1.msra.mxu0 0.0
    %93 = vmatprep.subr.mxu0 0.0
    %94 = vmatpush1.msra.mxu0 0.0
    %95 = vmatprep.subr.mxu0 0.0
    %96 = vmatpush1.msra.mxu0 0.0
    %97 = vmatprep.subr.mxu0 0.0
    %98 = vmatpush1.msra.mxu0 0.0
    %99 = vmatprep.subr.mxu0 0.0
    %100 = vmatpush1.msra.mxu0 0.0
    %101 = vmatprep.subr.mxu0 0.0
    %102 = vmatpush1.msra.mxu0 0.0
    %103 = vmatprep.subr.mxu0 0.0
    %104 = vmatpush1.msra.mxu0 0.0
    %105 = vmatprep.subr.mxu0 0.0
    %106 = vmatpush1.msra.mxu0 0.0
    %107 = vmatprep.subr.mxu0 0.0
    %108 = vmatpush1.msra.mxu0 0.0
    %109 = vmatprep.subr.mxu0 0.0
    %110 = vmatpush1.msra.mxu0 0.0
    %111 = vmatprep.subr.mxu0 0.0
    %112 = vmatpush1.msra.mxu0 0.0
    %113 = vmatprep.subr.mxu0 0.0
    %114 = vmatpush1.msra.mxu0 0.0
    %115 = vmatprep.subr.mxu0 0.0
    %116 = vmatpush1.msra.mxu0 0.0
    %117 = vmatprep.subr.mxu0 0.0
    %118 = vmatpush1.msra.mxu0 0.0
    %119 = vmatprep.subr.mxu0 0.0
    %120 = vmatpush1.msra.mxu0 0.0
    %121 = vmatprep.subr.mxu0 0.0
    %122 = vmatpush1.msra.mxu0 0.0
    %123 = vmatprep.subr.mxu0 0.0
    %124 = vmatpush1.msra.mxu0 0.0
    %125 = vmatprep.subr.mxu0 0.0
    %126 = vmatpush1.msra.mxu0 0.0
    %127 = vmatprep.subr.mxu0 0.0
    %128 = vmatpush1.msra.mxu0 0.0
    %129 = vmatprep.subr.mxu0 0.0
    %130 = vmatpush1.msra.mxu0 0.0
    %131 = vmatprep.subr.mxu0 0.0
    %132 = vmatpush1.msra.mxu0 0.0
    %133 = vmatprep.subr.mxu0 0.0
    %134 = vmatpush1.msra.mxu0 0.0
    %135 = vmatprep.subr.mxu0 0.0
    %136 = vmatpush1.msra.mxu0 0.0
    %137 = vmatprep.mubr.f32.mxu0 0.0
    %138 = vmatmul.mubr.f32.gmra.mrb[0].mxu0 %v62
    %v139 = vpop.f32.mrb[0].mxu0
    %v140 = vadd.f32 0.0, %v139
    %v141 = vpop.f32.mrb[0].mxu0
    %v142 = vadd.f32 0.0, %v141
    %143 = vmatprep.mubr.f32.mxu0 0.0
    %144 = vmatmul.mubr.f32.gmra.mrb[0].mxu0 %v65
    %v145 = vpop.f32.mrb[0].mxu0
    %v146 = vadd.f32 0.0, %v145
    %v147 = vpop.f32.mrb[0].mxu0
    %v148 = vadd.f32 0.0, %v147
    %149 = vmatprep.mubr.f32.mxu0 0.0
    %150 = vmatmul.mubr.f32.gmra.mrb[0].mxu0 %v68
    %v151 = vpop.f32.mrb[0].mxu0
    %v152 = vadd.f32 0.0, %v151
    %v153 = vpop.f32.mrb[0].mxu0
    %v154 = vadd.f32 0.0, %v153
    %155 = vmatprep.mubr.f32.mxu0 0.0
    %156 = vmatmul.mubr.f32.gmra.mrb[0].mxu0 %v71
    %v157 = vpop.f32.mrb[0].mxu0
    %v158 = vadd.f32 0.0, %v157
    %v159 = vpop.f32.mrb[0].mxu0
    %v160 = vadd.f32 0.0, %v159
    %161 = vdwg.mxu0
    %162 = vmatprep.subr.mxu0 %v47
    %163 = vmatpush1.msra.mxu0 %v46
    %164 = vmatprep.subr.mxu0 %v51
    %165 = vmatpush1.msra.mxu0 %v50
    %166 = vmatprep.subr.mxu0 %v55
    %167 = vmatpush1.msra.mxu0 %v54
    %168 = vmatprep.subr.mxu0 %v59
    %169 = vmatpush1.msra.mxu0 %v58
    %170 = vmatprep.subr.mxu0 0.0
    %171 = vmatpush1.msra.mxu0 0.0
    %172 = vmatprep.subr.mxu0 0.0
    %173 = vmatpush1.msra.mxu0 0.0
    %174 = vmatprep.subr.mxu0 0.0
    %175 = vmatpush1.msra.mxu0 0.0
    %176 = vmatprep.subr.mxu0 0.0
    %177 = vmatpush1.msra.mxu0 0.0
    %178 = vmatprep.subr.mxu0 0.0
    %179 = vmatpush1.msra.mxu0 0.0
    %180 = vmatprep.subr.mxu0 0.0
    %181 = vmatpush1.msra.mxu0 0.0
    %182 = vmatprep.subr.mxu0 0.0
    %183 = vmatpush1.msra.mxu0 0.0
    %184 = vmatprep.subr.mxu0 0.0
    %185 = vmatpush1.msra.mxu0 0.0
    %186 = vmatprep.subr.mxu0 0.0
    %187 = vmatpush1.msra.mxu0 0.0
    %188 = vmatprep.subr.mxu0 0.0
    %189 = vmatpush1.msra.mxu0 0.0
    %190 = vmatprep.subr.mxu0 0.0
    %191 = vmatpush1.msra.mxu0 0.0
    %192 = vmatprep.subr.mxu0 0.0
    %193 = vmatpush1.msra.mxu0 0.0
    %194 = vmatprep.subr.mxu0 0.0
    %195 = vmatpush1.msra.mxu0 0.0
    %196 = vmatprep.subr.mxu0 0.0
    %197 = vmatpush1.msra.mxu0 0.0
    %198 = vmatprep.subr.mxu0 0.0
    %199 = vmatpush1.msra.mxu0 0.0
    %200 = vmatprep.subr.mxu0 0.0
    %201 = vmatpush1.msra.mxu0 0.0
    %202 = vmatprep.subr.mxu0 0.0
    %203 = vmatpush1.msra.mxu0 0.0
    %204 = vmatprep.subr.mxu0 0.0
    %205 = vmatpush1.msra.mxu0 0.0
    %206 = vmatprep.subr.mxu0 0.0
    %207 = vmatpush1.msra.mxu0 0.0
    %208 = vmatprep.subr.mxu0 0.0
    %209 = vmatpush1.msra.mxu0 0.0
    %210 = vmatprep.subr.mxu0 0.0
    %211 = vmatpush1.msra.mxu0 0.0
    %212 = vmatprep.subr.mxu0 0.0
    %213 = vmatpush1.msra.mxu0 0.0
    %214 = vmatprep.subr.mxu0 0.0
    %215 = vmatpush1.msra.mxu0 0.0
    %216 = vmatprep.subr.mxu0 0.0
    %217 = vmatpush1.msra.mxu0 0.0
    %218 = vmatprep.subr.mxu0 0.0
    %219 = vmatpush1.msra.mxu0 0.0
    %220 = vmatprep.subr.mxu0 0.0
    %221 = vmatpush1.msra.mxu0 0.0
    %222 = vmatprep.subr.mxu0 0.0
    %223 = vmatpush1.msra.mxu0 0.0
    %224 = vmatprep.subr.mxu0 0.0
    %225 = vmatpush1.msra.mxu0 0.0
    %226 = vmatprep.mubr.f32.mxu0 0.0
    %227 = vmatmul.mubr.f32.gmra.mrb[0].mxu0 %v62
    %v228 = vpop.f32.mrb[0].mxu0
    %v229 = vadd.f32 0.0, %v228
    %v230 = vpop.f32.mrb[0].mxu0
    %v231 = vadd.f32 0.0, %v230
    %232 = vmatprep.mubr.f32.mxu0 0.0
    %233 = vmatmul.mubr.f32.gmra.mrb[0].mxu0 %v65
    %v234 = vpop.f32.mrb[0].mxu0
    %v235 = vadd.f32 0.0, %v234
    %v236 = vpop.f32.mrb[0].mxu0
    %v237 = vadd.f32 0.0, %v236
    %238 = vmatprep.mubr.f32.mxu0 0.0
    %239 = vmatmul.mubr.f32.gmra.mrb[0].mxu0 %v68
    %v240 = vpop.f32.mrb[0].mxu0
    %v241 = vadd.f32 0.0, %v240
    %v242 = vpop.f32.mrb[0].mxu0
    %v243 = vadd.f32 0.0, %v242
    %244 = vmatprep.mubr.f32.mxu0 0.0
    %245 = vmatmul.mubr.f32.gmra.mrb[0].mxu0 %v71
    %v246 = vpop.f32.mrb[0].mxu0
    %v247 = vadd.f32 0.0, %v246
    %v248 = vpop.f32.mrb[0].mxu0
    %v249 = vadd.f32 0.0, %v248
    %250 = vdwg.mxu0
    %v251 = vxor.u32 %v229, 2147483648
    %v252 = vxor.u32 %v231, 2147483648
    %v253 = vxor.u32 %v235, 2147483648
    %v254 = vxor.u32 %v237, 2147483648
    %v255 = vxor.u32 %v241, 2147483648
    %v256 = vxor.u32 %v243, 2147483648
    %v257 = vxor.u32 %v247, 2147483648
    %v258 = vxor.u32 %v249, 2147483648
    %v259 = vmul.f32 %v251, 1.442695
    %v260 = vpow.pop %v259
    %v261 = vmul.f32 %v252, 1.442695
    %v262 = vpow.pop %v261
    %v263 = vmul.f32 %v253, 1.442695
    %v264 = vpow.pop %v263
    %v265 = vmul.f32 %v254, 1.442695
    %v266 = vpow.pop %v265
    %v267 = vmul.f32 %v255, 1.442695
    %v268 = vpow.pop %v267
    %v269 = vmul.f32 %v256, 1.442695
    %v270 = vpow.pop %v269
    %v271 = vmul.f32 %v257, 1.442695
    %v272 = vpow.pop %v271
    %v273 = vmul.f32 %v258, 1.442695
    %v274 = vpow.pop %v273
    %v275 = vadd.f32 %v260, 1.0
    %v276 = vadd.f32 %v262, 1.0
    %v277 = vadd.f32 %v264, 1.0
    %v278 = vadd.f32 %v266, 1.0
    %v279 = vadd.f32 %v268, 1.0
    %v280 = vadd.f32 %v270, 1.0
    %v281 = vadd.f32 %v272, 1.0
    %v282 = vadd.f32 %v274, 1.0
    %v283 = vrcp.pop %v275
    %v284 = vmul.f32 1.0, %v283
    %v285 = vrcp.pop %v276
    %v286 = vmul.f32 1.0, %v285
    %v287 = vrcp.pop %v277
    %v288 = vmul.f32 1.0, %v287
    %v289 = vrcp.pop %v278
    %v290 = vmul.f32 1.0, %v289
    %v291 = vrcp.pop %v279
    %v292 = vmul.f32 1.0, %v291
    %v293 = vrcp.pop %v280
    %v294 = vmul.f32 1.0, %v293
    %v295 = vrcp.pop %v281
    %v296 = vmul.f32 1.0, %v295
    %v297 = vrcp.pop %v282
    %v298 = vmul.f32 1.0, %v297
    %v299 = vmul.f32 %v284, %v140
    %v300 = vmul.f32 %v286, %v142
    %v301 = vmul.f32 %v288, %v146
    %v302 = vmul.f32 %v290, %v148
    %v303 = vmul.f32 %v292, %v152
    %v304 = vmul.f32 %v294, %v154
    %v305 = vmul.f32 %v296, %v158
    %v306 = vmul.f32 %v298, %v160
    %v307 = vmax.f32 %v299, 0.0
    %v308 = vmax.f32 %v300, 0.0
    %v309 = vmax.f32 %v301, 0.0
    %v310 = vmax.f32 %v302, 0.0
    %v311 = vmax.f32 %v303, 0.0
    %v312 = vmax.f32 %v304, 0.0
    %v313 = vmax.f32 %v305, 0.0
    %v314 = vmax.f32 %v306, 0.0
    %315 = vst [vmem:[#allocation7] sm:$0xff] %v307
    %316 = vst.msk [vmem:[#allocation7 + $0x8] sm:$0xff] %vm60, %v308
    %317 = vst [vmem:[#allocation7 + $0x10] sm:$0xff] %v309
    %318 = vst.msk [vmem:[#allocation7 + $0x18] sm:$0xff] %vm60, %v310
    %319 = vst [vmem:[#allocation7 + $0x20] sm:$0xff] %v311
    %320 = vst.msk [vmem:[#allocation7 + $0x28] sm:$0xff] %vm60, %v312
    %321 = vst [vmem:[#allocation7 + $0x30] sm:$0xff] %v313
    %322 = vst.msk [vmem:[#allocation7 + $0x38] sm:$0xff] %vm60, %v314
    // Predicated region
    $region18: #{tpu_custom_call.1} parent=1 // pred_check
      _
    $region19: #{tpu_custom_call.1} parent=1 // pred_check_branch
      %324 = sbr.rel (0) target = $region21
    $region20: #{tpu_custom_call.1} parent=1 // pred_region
      %s326 = ssub.s32 1024, 1024
      %327 = vsyncadd [#allocation4], %s326
      %s328 = sshll.u32 [#allocation7], 4
      %s329 = int_to_ptr.vmem [resolvable:$true] %s328
      %334 = dma.vmem_to_hbm [thread:$0]  %s329, 1024, %s2, [#allocation4], 256, 256, 16
    $region21: #{tpu_custom_call.1} parent=1 // pred_fallthru
      _
    // Predicated region
    $region22: #{tpu_custom_call.1} parent=1 // pred_check
      _
    $region23: #{tpu_custom_call.1} parent=1 // pred_check_branch
      %336 = sbr.rel (0) target = $region25
    $region24: #{tpu_custom_call.1} parent=1 // pred_region
      %337 = dma.done [#allocation4], 1024
    $region25: #{tpu_custom_call.1} parent=1 // pred_fallthru
      _
    %338 = vsyncpa [#allocation3], 1
    %339 = vsyncpa [#allocation6], 1
    %340 = vsyncpa [#allocation4], 1

</llo_original>
